<compile_context>
chip_gen: v5e
topology: v5e:2x2
jax: 0.10.0
libtpu: 0.0.40
codegen_flags: <defaults>
</compile_context>

<pallas_src>
import functools

import jax
import jax.numpy as jnp
from jax.experimental import pallas as pl
from jax.experimental.pallas import tpu as pltpu


def _round_up(x, m):
    return (x + m - 1) // m * m


def rs_kernel(x_ref, w_ref, b_ref, o_ref):
    # Linear: logits = x @ W^T + b  (weight pre-transposed to [E, Np], streamed as bf16).
    logits = jnp.dot(x_ref[...], w_ref[...], preferred_element_type=jnp.float32)
    logits = logits + b_ref[...]  # [tB, Np] + [1, Np]; padded columns carry -1e30
    # Row-local, numerically stable softmax over the item axis (== torch Softmax(dim=1)).
    m = jnp.max(logits, axis=-1, keepdims=True)
    e = jnp.exp(logits - m)
    s = jnp.sum(e, axis=-1, keepdims=True)
    o_ref[...] = (e * pl.reciprocal(s, approx=True)).astype(o_ref.dtype)


@functools.partial(jax.jit, static_argnames=("block_b",))
def rs_model_forward(x, w, b, *, block_b=256):
    """Forward pass of RS_Model.

    x: [B, E] float, w: [N, E] (PyTorch Linear weight layout), b: [N] float.
    Returns softmax(x @ w.T + b, axis=1) as float32 [B, N].
    """
    B, E = x.shape
    N = w.shape[0]

    # Lane-dense item axis: pad N up to a multiple of 128 (masked via -1e30 bias).
    n_padded = _round_up(N, 128)
    # Batch tile: multiple of 8 sublanes, at most block_b; pad B up to a whole tile.
    tb = min(_round_up(block_b, 8), _round_up(B, 8))
    b_padded = _round_up(B, tb)

    stream_dtype = jnp.bfloat16  # halves weight/activation HBM bytes; f32 MXU accumulate
    w_t = jnp.zeros((E, n_padded), stream_dtype).at[:, :N].set(w.T.astype(stream_dtype))
    bias = jnp.full((1, n_padded), -1e30, jnp.float32).at[0, :N].set(b.astype(jnp.float32))
    x_p = jnp.zeros((b_padded, E), stream_dtype).at[:B, :].set(x.astype(stream_dtype))

    # VMEM budget: double-buffered x/out tiles + resident weight/bias (cap at 64 MiB,
    # the v7x physical size). If a real model's E*N weight overflows this, tile N with
    # an online softmax instead of raising the cap.
    block_bytes = (2 * tb * E * 2          # x tile, double-buffered, bf16
                   + 2 * E * n_padded * 2  # weight (resident; budget 2x), bf16
                   + 2 * n_padded * 4      # bias, f32
                   + 2 * tb * n_padded * 4)  # out tile, double-buffered, f32
    vmem_limit = int(min(64 * 1024 * 1024, max(32 * 1024 * 1024, 2 * block_bytes)))

    out = pl.pallas_call(
        rs_kernel,
        out_shape=jax.ShapeDtypeStruct((b_padded, n_padded), jnp.float32),
        grid=(b_padded // tb,),
        in_specs=[
            pl.BlockSpec((tb, E), lambda i: (i, 0)),        # x: new tile per grid step
            # Constant index_maps: weight & bias are fetched once, reused across tiles.
            # TODO(synk): for very large E*N weights add pipeline_mode=pl.Buffered(1)
            # (single-buffer the grid-invariant weight) or tile N with online softmax.
            pl.BlockSpec((E, n_padded), lambda i: (0, 0)),  # weight, VMEM-resident
            pl.BlockSpec((1, n_padded), lambda i: (0, 0)),  # bias, VMEM-resident
        ],
        out_specs=pl.BlockSpec((tb, n_padded), lambda i: (i, 0)),
        compiler_params=pltpu.CompilerParams(
            dimension_semantics=("parallel",),  # batch tiles independent (v7x: 2 TCs)
            vmem_limit_bytes=vmem_limit,
        ),
    )(x_p, w_t, bias)
    return out[:B, :N]


if __name__ == "__main__":
    # Small demo shapes chosen to exercise both padding paths:
    #   batch=50  -> padded to a multiple of the 16-row batch tile (grid of 4 steps)
    #   item_num=200 -> padded to 256 lanes, masked before the softmax
    batch = 50
    embedding_size = 32
    item_num = 200

    key = jax.random.PRNGKey(0)
    k_x, k_w, k_b = jax.random.split(key, 3)

    # Parameter init mirroring the PyTorch module:
    #   Linear weight: xavier_normal_(gain=1) -> std = sqrt(2 / (fan_in + fan_out))
    #   Linear bias:   torch default uniform(-1/sqrt(fan_in), 1/sqrt(fan_in))
    xavier_std = (2.0 / (embedding_size + item_num)) ** 0.5
    w = jax.random.normal(k_w, (item_num, embedding_size), jnp.float32) * xavier_std
    bound = 1.0 / (embedding_size ** 0.5)
    b = jax.random.uniform(k_b, (item_num,), jnp.float32, minval=-bound, maxval=bound)
    x = jax.random.normal(k_x, (batch, embedding_size), jnp.float32)

    # Small batch tile here so the demo actually runs multiple pipelined grid steps;
    # keep the default block_b=256 for realistic batch sizes.
    out = rs_model_forward(x, w, b, block_b=16)
    out = jax.block_until_ready(out)

    # Reference in plain JAX (f32): softmax(x @ w.T + b, dim=1).
    ref = jax.nn.softmax(x @ w.T + b, axis=1)
    assert out.shape == (batch, item_num)
    # bf16 streaming + approx reciprocal -> tolerances looser than pure-f32.
    assert jnp.allclose(out, ref, atol=5e-3, rtol=5e-2), float(jnp.max(jnp.abs(out - ref)))
    assert jnp.allclose(jnp.sum(out, axis=1), 1.0, atol=5e-3)

    print("KERNEL_OK")
</pallas_src>

<mosaic_0001>
module attributes {stable_mosaic.version = 11 : i64} {
  func.func @rs_kernel(%arg0: i32, %arg1: memref<16x32xbf16, #tpu.memory_space<vmem>>, %arg2: memref<32x256xbf16, #tpu.memory_space<vmem>>, %arg3: memref<1x256xf32, #tpu.memory_space<vmem>>, %arg4: memref<16x256xf32, #tpu.memory_space<vmem>>) attributes {dimension_semantics = [#tpu.dimension_semantics<parallel>], iteration_bounds = array<i64: 4>, scalar_prefetch = 0 : i64, scratch_operands = 0 : i64, tpu.core_type = #tpu.core_type<tc>, window_params = [{transform_indices = @transform_0, window_bounds = array<i64: 16, 32>}, {pipeline_mode = #tpu.pipeline_mode<synchronous>, transform_indices = @transform_1, window_bounds = array<i64: 32, 256>}, {pipeline_mode = #tpu.pipeline_mode<synchronous>, transform_indices = @transform_2, window_bounds = array<i64: 1, 256>}, {transform_indices = @transform_3, window_bounds = array<i64: 16, 256>}]} {
    %c0 = arith.constant 0 : index
    %c0_0 = arith.constant 0 : index
    %0 = vector.load %arg1[%c0, %c0_0] : memref<16x32xbf16, #tpu.memory_space<vmem>>, vector<16x32xbf16>
    %c0_1 = arith.constant 0 : index
    %c0_2 = arith.constant 0 : index
    %1 = vector.load %arg2[%c0_1, %c0_2] : memref<32x256xbf16, #tpu.memory_space<vmem>>, vector<32x256xbf16>
    %cst = arith.constant dense<0.000000e+00> : vector<16x256xf32>
    %2 = tpu.matmul %0, %1, %cst {dimension_numbers = #tpu.dot_dimension_numbers<[1], [0], [0], [1], [0, 0, 1, 1], [], []>} : vector<16x32xbf16>, vector<32x256xbf16>, vector<16x256xf32> -> vector<16x256xf32>
    %c0_3 = arith.constant 0 : index
    %c0_4 = arith.constant 0 : index
    %3 = vector.load %arg3[%c0_3, %c0_4] : memref<1x256xf32, #tpu.memory_space<vmem>>, vector<1x256xf32>
    %4 = vector.broadcast %3 : vector<1x256xf32> to vector<16x256xf32>
    %5 = arith.addf %2, %4 : vector<16x256xf32>
    %cst_5 = arith.constant dense<0xFF800000> : vector<16xf32>
    %6 = vector.multi_reduction <maximumf>, %5, %cst_5 [1] : vector<16x256xf32> to vector<16xf32>
    %7 = vector.shape_cast %6 : vector<16xf32> to vector<16x1xf32>
    %8 = vector.broadcast %7 : vector<16x1xf32> to vector<16x256xf32>
    %9 = arith.subf %5, %8 : vector<16x256xf32>
    %10 = math.exp %9 : vector<16x256xf32>
    %cst_6 = arith.constant dense<0.000000e+00> : vector<16xf32>
    %11 = vector.multi_reduction <add>, %10, %cst_6 [1] : vector<16x256xf32> to vector<16xf32>
    %12 = vector.shape_cast %11 : vector<16xf32> to vector<16x1xf32>
    %13 = tpu.reciprocal %12 {approx = true} : vector<16x1xf32> -> vector<16x1xf32>
    %14 = vector.broadcast %13 : vector<16x1xf32> to vector<16x256xf32>
    %15 = arith.mulf %10, %14 : vector<16x256xf32>
    %c0_7 = arith.constant 0 : index
    %c0_8 = arith.constant 0 : index
    %16 = vector.load %arg4[%c0_7, %c0_8] : memref<16x256xf32, #tpu.memory_space<vmem>>, vector<16x256xf32>
    tpu.vector_store %arg4[%c0_7, %c0_8], %15 {strides = array<i32>} : memref<16x256xf32, #tpu.memory_space<vmem>>, vector<16x256xf32>,
    return
  }
  func.func @transform_0(%arg0: i32) -> (i32, i32) {
    %c0_i32 = arith.constant 0 : i32
    %c0_i32_0 = arith.constant 0 : i32
    return %arg0, %c0_i32 : i32, i32
  }
  func.func @transform_1(%arg0: i32) -> (i32, i32) {
    %c0_i32 = arith.constant 0 : i32
    %c0_i32_0 = arith.constant 0 : i32
    %c0_i32_1 = arith.constant 0 : i32
    return %c0_i32, %c0_i32_0 : i32, i32
  }
  func.func @transform_2(%arg0: i32) -> (i32, i32) {
    %c0_i32 = arith.constant 0 : i32
    %c0_i32_0 = arith.constant 0 : i32
    %c0_i32_1 = arith.constant 0 : i32
    return %c0_i32, %c0_i32_0 : i32, i32
  }
  func.func @transform_3(%arg0: i32) -> (i32, i32) {
    %c0_i32 = arith.constant 0 : i32
    %c0_i32_0 = arith.constant 0 : i32
    return %arg0, %c0_i32 : i32, i32
  }
}

</mosaic_0001>

<llo_original>
// kernel: rs_model_forward.1
$region0: #{rs_model_forward.1}
  #allocation0 [shape = 'u32[]', space=smem, size = 0x4, offset = 0x4, fixed_abs, tag = 'smem constant byte address 0x4 - core index']
  #allocation1 [shape = 'u32[72,128]{1,0:T(1,128)}', space=vmem, size = 0x9000, scoped, tag = 'internal scratch']
  %s0 = inlined_call_operand.vmem [shape: bf16[64,32], index: 0, kind: input, shape index: {}]
  %s1 = inlined_call_operand.vmem [shape: bf16[32,256], index: 1, kind: input, shape index: {}]
  %s2 = inlined_call_operand.vmem [shape: f32[1,256], index: 2, kind: input, shape index: {}]
  %s3 = inlined_call_operand.vmem [shape: f32[64,256], index: 3, kind: output, shape index: {}]
  %s4 = sld [smem:[#allocation0]]
  $region45: #{rs_model_forward.1} parent=0
    _
  %s6 = ssub.s32 1, %s4
  %s7 = scalar_select 0, %s6, %s4
  loop: start=0, step=1, limit=6
  $region2: #{rs_model_forward.1} parent=0 // loop_pre_header
    _
  $region3: #{rs_model_forward.1} parent=0 // loop_header
    %s9 = sphi 0, %s13
    %p10 = scmp.ge.s32.totalorder %s9, 6
    %s19 = sphi 0, %s21
    %s22 = sphi 0, %s19
    %s23 = sphi 0, %s22
    %s39 = sphi 0, %s23
    %s43 = sphi 0, %s43
    %s45 = sphi 0, %s43
    %s46 = sphi 0, %s45
    %s60 = sphi 0, %s46
    %s64 = sphi 0, %s64
    %s66 = sphi 0, %s64
    %s67 = sphi 0, %s66
    %s81 = sphi 0, %s67
    %s87 = sphi 0, %s89
    %s90 = sphi 0, %s87
    %s91 = sphi 0, %s90
    %s107 = sphi 0, %s91
  $region4: #{rs_model_forward.1} parent=0 // loop_header_branch
    %12 = sbr.rel (%p10) target = $region8
  $region5: #{rs_model_forward.1} parent=0 // loop_body
    %s14 = ssub.s32 %s9, 1
    %s15 = ssub.s32 %s9, 2
    %s16 = sadd.s32 %s9, 1
    %s17 = ssub.s32 %s9, %s16
    %p18 = scmp.eq.s32.totalorder %s17, 0
    %s20 = sadd.s32 %s19, 1
    %s21 = scalar_select %p18, %s19, %s20
    %p24 = pneg %p18
    %p25 = scmp.eq.s32.totalorder %s9, 3
    %p26 = por %p24, %p25
    %p27 = scmp.ne.s32.totalorder %s19, %s22
    %p28 = scmp.eq.s32.totalorder %s9, 0
    %p29 = por %p27, %p28
    %p30 = scmp.ne.s32.totalorder %s19, %s22
    %p31 = scmp.eq.s32.totalorder %s14, 3
    %p32 = por %p30, %p31
    %p33 = scmp.ne.s32.totalorder %s22, %s23
    %p34 = scmp.eq.s32.totalorder %s14, 0
    %p35 = por %p33, %p34
    %p36 = scmp.ne.s32.totalorder %s22, %s23
    %p37 = scmp.eq.s32.totalorder %s15, 3
    %p38 = por %p36, %p37
    %p40 = scmp.ne.s32.totalorder %s23, %s39
    %p41 = scmp.eq.s32.totalorder %s15, 0
    %p42 = por %p40, %p41
    %s44 = sadd.s32 %s43, 1
    %p47 = scmp.eq.s32.totalorder %s9, 3
    %p48 = scmp.ne.s32.totalorder %s43, %s45
    %p49 = scmp.eq.s32.totalorder %s9, 0
    %p50 = por %p48, %p49
    %p51 = scmp.ne.s32.totalorder %s43, %s45
    %p52 = scmp.eq.s32.totalorder %s14, 3
    %p53 = por %p51, %p52
    %p54 = scmp.ne.s32.totalorder %s45, %s46
    %p55 = scmp.eq.s32.totalorder %s14, 0
    %p56 = por %p54, %p55
    %p57 = scmp.ne.s32.totalorder %s45, %s46
    %p58 = scmp.eq.s32.totalorder %s15, 3
    %p59 = por %p57, %p58
    %p61 = scmp.ne.s32.totalorder %s46, %s60
    %p62 = scmp.eq.s32.totalorder %s15, 0
    %p63 = por %p61, %p62
    %s65 = sadd.s32 %s64, 1
    %p68 = scmp.eq.s32.totalorder %s9, 3
    %p69 = scmp.ne.s32.totalorder %s64, %s66
    %p70 = scmp.eq.s32.totalorder %s9, 0
    %p71 = por %p69, %p70
    %p72 = scmp.ne.s32.totalorder %s64, %s66
    %p73 = scmp.eq.s32.totalorder %s14, 3
    %p74 = por %p72, %p73
    %p75 = scmp.ne.s32.totalorder %s66, %s67
    %p76 = scmp.eq.s32.totalorder %s14, 0
    %p77 = por %p75, %p76
    %p78 = scmp.ne.s32.totalorder %s66, %s67
    %p79 = scmp.eq.s32.totalorder %s15, 3
    %p80 = por %p78, %p79
    %p82 = scmp.ne.s32.totalorder %s67, %s81
    %p83 = scmp.eq.s32.totalorder %s15, 0
    %p84 = por %p82, %p83
    %s85 = ssub.s32 %s9, %s16
    %p86 = scmp.eq.s32.totalorder %s85, 0
    %s88 = sadd.s32 %s87, 1
    %s89 = scalar_select %p86, %s87, %s88
    %p92 = pneg %p86
    %p93 = scmp.eq.s32.totalorder %s9, 3
    %p94 = por %p92, %p93
    %p95 = scmp.ne.s32.totalorder %s87, %s90
    %p96 = scmp.eq.s32.totalorder %s9, 0
    %p97 = por %p95, %p96
    %p98 = scmp.ne.s32.totalorder %s87, %s90
    %p99 = scmp.eq.s32.totalorder %s14, 3
    %p100 = por %p98, %p99
    %p101 = scmp.ne.s32.totalorder %s90, %s91
    %p102 = scmp.eq.s32.totalorder %s14, 0
    %p103 = por %p101, %p102
    %p104 = scmp.ne.s32.totalorder %s90, %s91
    %p105 = scmp.eq.s32.totalorder %s15, 3
    %p106 = por %p104, %p105
    %p108 = scmp.ne.s32.totalorder %s91, %s107
    %p109 = scmp.eq.s32.totalorder %s15, 0
    %p110 = por %p108, %p109
    %p111 = scmp.le.s32.totalorder 1, %s9
    %p112 = scmp.lt.s32.totalorder %s9, 5
    %p113 = pnand %p111, %p112
    %p114 = pneg %p113
    // Predicated region
    $region9: #{rs_model_forward.1} parent=5 // pred_check
      _
    $region10: #{rs_model_forward.1} parent=5 // pred_check_branch
      %116 = sbr.rel (%p113) target = $region12
    $region11: #{rs_model_forward.1} parent=5 // pred_region
      %s117 = ssub.s32 %s9, 1
      // Predicated region
      $region13: #{rs_model_forward.1} parent=11 // pred_check
        %p118 = pneg %p56
      $region14: #{rs_model_forward.1} parent=11 // pred_check_branch
        %120 = sbr.rel (%p118) target = $region16
      $region15: #{rs_model_forward.1} parent=11 // pred_region
        _
      $region16: #{rs_model_forward.1} parent=11 // pred_fallthru
        _
      // Predicated region
      $region17: #{rs_model_forward.1} parent=11 // pred_check
        %p121 = pneg %p77
      $region18: #{rs_model_forward.1} parent=11 // pred_check_branch
        %123 = sbr.rel (%p121) target = $region20
      $region19: #{rs_model_forward.1} parent=11 // pred_region
        _
      $region20: #{rs_model_forward.1} parent=11 // pred_fallthru
        _
    $region12: #{rs_model_forward.1} parent=5 // pred_fallthru
      _
    %p124 = scmp.lt.s32.totalorder %s9, 4
    // Predicated region
    $region21: #{rs_model_forward.1} parent=5 // pred_check
      %p125 = pneg %p124
    $region22: #{rs_model_forward.1} parent=5 // pred_check_branch
      %127 = sbr.rel (%p125) target = $region24
    $region23: #{rs_model_forward.1} parent=5 // pred_region
      // Predicated region
      $region25: #{rs_model_forward.1} parent=23 // pred_check
        %p128 = pneg %p29
      $region26: #{rs_model_forward.1} parent=23 // pred_check_branch
        %130 = sbr.rel (%p128) target = $region28
      $region27: #{rs_model_forward.1} parent=23 // pred_region
        %s131 = smul.u32 2, %s9
        %p132 = scmp.lt.s32.totalorder %s131, 7
        %s133 = scalar_select %p132, %s131, 7
        %s134 = smul.addr %s133, 4
        %s135 = scalar_lea.vmem %s0, %s134
        %s136 = smul.u32 2, %s9
      $region28: #{rs_model_forward.1} parent=23 // pred_fallthru
        _
    $region24: #{rs_model_forward.1} parent=5 // pred_fallthru
      _
    %p137 = scmp.le.s32.totalorder 1, %s9
    %p138 = scmp.lt.s32.totalorder %s9, 5
    %p139 = pnand %p137, %p138
    %p140 = pneg %p139
    // Predicated region
    $region29: #{rs_model_forward.1} parent=5 // pred_check
      _
    $region30: #{rs_model_forward.1} parent=5 // pred_check_branch
      %142 = sbr.rel (%p139) target = $region32
    $region31: #{rs_model_forward.1} parent=5 // pred_region
      %s143 = ssub.s32 %s9, 1
      %s144 = smul.u32 2, %s14
      %p145 = scmp.lt.s32.totalorder %s144, 7
      %s146 = scalar_select %p145, %s144, 7
      %s147 = smul.addr %s146, 4
      %s148 = scalar_lea.vmem %s0, %s147
      %p149 = pneg %p35
      %p150 = pneg %p32
      %p151 = pneg %p56
      %p152 = pneg %p53
      %p153 = pneg %p77
      %p154 = pneg %p74
      %p155 = pneg %p103
      %p156 = pneg %p100
      %s157 = smul.u32 2, %s14
      %p158 = scmp.lt.s32.totalorder %s157, 7
      %s159 = scalar_select %p158, %s157, 7
      %s160 = smul.addr %s159, 2
      %s161 = smul.addr %s160, 8
      %s162 = scalar_lea.vmem %s3, %s161
      %s163 = smul.u32 2, %s14
      %p164 = scmp.lt.s32.totalorder %s163, 7
      %s165 = scalar_select %p164, %s163, 7
      %s166 = smul.addr %s165, 4
      %s167 = scalar_lea.vmem %s0, %s166
      %s168 = smul.u32 2, %s14
      %s169 = smul.u32 2, %s14
      %p170 = scmp.lt.s32.totalorder %s169, 7
      %s171 = scalar_select %p170, %s169, 7
      %s172 = smul.addr %s171, 2
      %s173 = smul.addr %s172, 8
      %s174 = scalar_lea.vmem %s3, %s173
      %s175 = smul.u32 2, %s14
      %v177 = vld [vmem:[%s167] sm:$0xf]
      %v178 = vld [vmem:[%s167 + $0x4] sm:$0xf]
      %v179 = vld [vmem:[%s1] sm:$0xff]
      %v180 = vld [vmem:[%s1 + $0x8] sm:$0xff]
      %v181 = vld [vmem:[%s1 + $0x10] sm:$0xff]
      %v182 = vld [vmem:[%s1 + $0x18] sm:$0xff]
      %v183 = vld [vmem:[%s2] sm:$0x3]
      %v185 = vperm.slane %v183, 0
      %v186 = vperm.slane %v183, 1
      %v191 = vunpack.c.l.b16 %v177
      %v192 = vunpack.c.l.b16 %v178
      %v193 = vpack.c.b16 %v192, %v191
      %v198 = vunpack.c.l.b16 %v179
      %v199 = vunpack.c.h.b16 %v179
      %v200 = vunpack.c.l.b16 %v180
      %v201 = vunpack.c.h.b16 %v180
      %v202 = vunpack.c.l.b16 %v181
      %v203 = vunpack.c.h.b16 %v181
      %v204 = vunpack.c.l.b16 %v182
      %v205 = vunpack.c.h.b16 %v182
      %v206 = vpack.c.b16 %v200, %v198
      %v207 = vpack.c.b16 %v201, %v199
      %v208 = vpack.c.b16 %v204, %v202
      %v209 = vpack.c.b16 %v205, %v203
      %vm214 = vcmask 261120
      %v216 = vsel %vm214, %v193, 0
      %218 = vmatpush.bf16.msra.mxu0 0
      %219 = vmatpush.bf16.msra.mxu0 0
      %220 = vmatpush.bf16.msra.mxu0 0
      %221 = vmatpush.bf16.msra.mxu0 0
      %222 = vmatpush.bf16.msra.mxu0 0
      %223 = vmatpush.bf16.msra.mxu0 0
      %224 = vmatpush.bf16.msra.mxu0 %v208
      %225 = vmatpush.bf16.msra.mxu0 %v206
      %226 = vmatmul.bf16.gmra.mxu0 %v216
      %v227 = vpop.f32.mrf.mxu0
      %v228 = vadd.f32 %v185, %v227
      %v229 = vpop.f32.mrf.mxu0
      %v230 = vadd.f32 %v185, %v229
      %231 = vdwg.mxu0
      %232 = vmatpush.bf16.msra.mxu0 0
      %233 = vmatpush.bf16.msra.mxu0 0
      %234 = vmatpush.bf16.msra.mxu0 0
      %235 = vmatpush.bf16.msra.mxu0 0
      %236 = vmatpush.bf16.msra.mxu0 0
      %237 = vmatpush.bf16.msra.mxu0 0
      %238 = vmatpush.bf16.msra.mxu0 %v209
      %239 = vmatpush.bf16.msra.mxu0 %v207
      %240 = vmatmul.bf16.gmra.mxu0 %v216
      %v241 = vpop.f32.mrf.mxu0
      %v242 = vadd.f32 %v186, %v241
      %v243 = vpop.f32.mrf.mxu0
      %v244 = vadd.f32 %v186, %v243
      %245 = vdwg.mxu0
      %v246 = vmax.f32 %v228, %v242
      %247 = vmax.xlane.f32.xlu0 %v246
      %v248 = vpop.xlane.xlu0 %247
      %v249 = vmax.f32 %v230, %v244
      %250 = vmax.xlane.f32.xlu0 %v249
      %v251 = vpop.xlane.xlu0 %250
      %v252 = vsub.f32 %v228, %v248
      %v253 = vsub.f32 %v242, %v248
      %v254 = vsub.f32 %v230, %v251
      %v255 = vsub.f32 %v244, %v251
      %v256 = vmul.f32 %v252, 1.442695
      %v257 = vpow.pop %v256
      %v258 = vmul.f32 %v253, 1.442695
      %v259 = vpow.pop %v258
      %v260 = vmul.f32 %v254, 1.442695
      %v261 = vpow.pop %v260
      %v262 = vmul.f32 %v255, 1.442695
      %v263 = vpow.pop %v262
      %v264 = vadd.f32 %v257, %v259
      %265 = vadd.xlane.f32.xlu0 %v264
      %v266 = vpop.xlane.xlu0 %265
      %v267 = vadd.f32 %v261, %v263
      %268 = vadd.xlane.f32.xlu0 %v267
      %v269 = vpop.xlane.xlu0 %268
      %v270 = vrcp.pop %v266
      %v271 = vrcp.pop %v269
      %v272 = vmul.f32 %v257, %v270
      %v273 = vmul.f32 %v259, %v270
      %v274 = vmul.f32 %v261, %v271
      %v275 = vmul.f32 %v263, %v271
      %276 = vst [vmem:[%s174] sm:$0xff] %v272
      %277 = vst [vmem:[%s174 + $0x8] sm:$0xff] %v273
      %278 = vst [vmem:[%s174 + $0x10] sm:$0xff] %v274
      %279 = vst [vmem:[%s174 + $0x18] sm:$0xff] %v275
      %s280 = smul.u32 2, %s14
      %p281 = scmp.lt.s32.totalorder %s280, 7
      %s282 = scalar_select %p281, %s280, 7
      %s283 = smul.addr %s282, 2
      %s284 = smul.addr %s283, 8
      %s285 = scalar_lea.vmem %s3, %s284
      // Predicated region
      $region33: #{rs_model_forward.1} parent=31 // pred_check
        %p286 = pneg %p100
      $region34: #{rs_model_forward.1} parent=31 // pred_check_branch
        %288 = sbr.rel (%p286) target = $region36
      $region35: #{rs_model_forward.1} parent=31 // pred_region
        %s289 = smul.u32 2, %s14
      $region36: #{rs_model_forward.1} parent=31 // pred_fallthru
        _
    $region32: #{rs_model_forward.1} parent=5 // pred_fallthru
      _
    %p290 = scmp.le.s32.totalorder 2, %s9
    // Predicated region
    $region37: #{rs_model_forward.1} parent=5 // pred_check
      %p291 = pneg %p290
    $region38: #{rs_model_forward.1} parent=5 // pred_check_branch
      %293 = sbr.rel (%p291) target = $region40
    $region39: #{rs_model_forward.1} parent=5 // pred_region
      %s294 = ssub.s32 %s9, 2
      // Predicated region
      $region41: #{rs_model_forward.1} parent=39 // pred_check
        %p295 = pneg %p106
      $region42: #{rs_model_forward.1} parent=39 // pred_check_branch
        %297 = sbr.rel (%p295) target = $region44
      $region43: #{rs_model_forward.1} parent=39 // pred_region
        %s298 = smul.u32 2, %s15
        %p299 = scmp.lt.s32.totalorder %s298, 7
        %s300 = scalar_select %p299, %s298, 7
        %s301 = smul.addr %s300, 2
        %s302 = smul.addr %s301, 8
        %s303 = scalar_lea.vmem %s3, %s302
      $region44: #{rs_model_forward.1} parent=39 // pred_fallthru
        _
    $region40: #{rs_model_forward.1} parent=5 // pred_fallthru
      _
  $region6: #{rs_model_forward.1} parent=0 // loop_footer
    %s13 = sadd.s32 1, %s9
  $region7: #{rs_model_forward.1} parent=0 // loop_footer_branch
    %8 = sbr.rel target = $region3
  $region8: #{rs_model_forward.1} parent=0 // loop_exit
    _

</llo_original>
